<compile_context>
chip_gen: v7x
topology: tpu7x:2x2x1
jax: 0.10.0
libtpu: 0.0.40
codegen_flags: <defaults>
</compile_context>

<pallas_src>
import functools

import jax
import jax.numpy as jnp
from jax.experimental import pallas as pl
from jax.experimental.pallas import tpu as pltpu


def policy_kernel(x_ref, w1_ref, b1_ref, w2_ref, b2_ref, wh_ref, bh_ref,
                  lo_ref, hi_ref, out_ref, *, mm_dtype):
    # fc1 + relu   (MXU matmul, f32 accumulation; bias/relu on the VPU in f32)
    h1 = jnp.dot(x_ref[...], w1_ref[...], preferred_element_type=jnp.float32)
    h1 = jnp.maximum(h1 + b1_ref[...], 0.0)

    # fc2 + relu
    h2 = jnp.dot(h1.astype(mm_dtype), w2_ref[...],
                 preferred_element_type=jnp.float32)
    h2 = jnp.maximum(h2 + b2_ref[...], 0.0)

    # fused heads -> (TB, 2*out_dim) = [mean || log_std]
    head = jnp.dot(h2.astype(mm_dtype), wh_ref[...],
                   preferred_element_type=jnp.float32)
    head = head + bh_ref[...]

    # per-column clamp: mean columns get (-fmax, +fmax), log_std columns get
    # (-20, 2) — bounds are tiny resident rows, broadcast along sublanes.
    head = jnp.minimum(jnp.maximum(head, lo_ref[...]), hi_ref[...])

    out_ref[...] = head.astype(out_ref.dtype)


def _choose_tiling(B, block_b):
    """Round batch to 8 sublanes; pick tile size / padded batch so per-step
    overhead is amortized (tiles up to 2048 rows), padding waste is minimal,
    and the grid has an even number of >= 2 steps (v7x's two TCs) when B > 8."""
    B8 = max(8, ((B + 7) // 8) * 8)
    if block_b is not None:
        block_b = max(8, (block_b // 8) * 8)
        n_steps = -(-B8 // block_b)
    else:
        if B8 <= 8:
            n_steps = 1
        else:
            n_steps = max(2, -(-B8 // 2048))       # tile cap 2048 rows
            if n_steps > 2 and n_steps % 2:
                n_steps += 1                       # even step count for v7x
        block_b = ((-(-B8 // n_steps) + 7) // 8) * 8
    return block_b, n_steps, block_b * n_steps


def policy_forward(x, params, *, block_b=None, use_bf16=False,
                   out_dtype=jnp.float32):
    """x: (B, input_dim) f32; params: PyTorch-equivalent weights stored
    transposed (W is (in, out)).  Returns (mean, log_std) as float32.

    use_bf16=True casts the matmul *operands* to bfloat16 (accumulation, bias,
    relu and clamp stay f32) — recommended default on v6e/v7x; keep False for
    exact f32 parity.  out_dtype=jnp.bfloat16 halves the output writeback."""
    B, in_dim = x.shape
    hidden = params["w1"].shape[1]
    out_dim = params["wm"].shape[1]
    head_w = 2 * out_dim

    # ---- fuse the two heads into one (hidden, 2*out_dim) weight/bias -------
    wh = jnp.concatenate([params["wm"], params["ws"]], axis=1)
    bh = jnp.concatenate([params["bm"], params["bs"]], axis=1)

    # per-column clamp bounds: mean -> (-fmax, fmax), log_std -> (-20, 2)
    fmax = float(jnp.finfo(jnp.float32).max)
    lo = jnp.concatenate([jnp.full((1, out_dim), -fmax, jnp.float32),
                          jnp.full((1, out_dim), -20.0, jnp.float32)], axis=1)
    hi = jnp.concatenate([jnp.full((1, out_dim), fmax, jnp.float32),
                          jnp.full((1, out_dim), 2.0, jnp.float32)], axis=1)

    block_b, n_steps, B_pad = _choose_tiling(B, block_b)
    x_in = jnp.pad(x, ((0, B_pad - B), (0, 0))) if B_pad != B else x

    w1, w2 = params["w1"], params["w2"]
    mm_dtype = jnp.bfloat16 if use_bf16 else jnp.float32
    if use_bf16:
        x_in = x_in.astype(jnp.bfloat16)
        w1, w2, wh = (a.astype(jnp.bfloat16) for a in (w1, w2, wh))

    kernel = functools.partial(policy_kernel, mm_dtype=mm_dtype)

    # advisory cost estimate — count lane-padded (128) byte traffic
    lane = lambda n: ((n + 127) // 128) * 128
    in_sz = 2 if use_bf16 else 4
    out_sz = jnp.dtype(out_dtype).itemsize
    flops = 2 * B_pad * (in_dim * hidden + hidden * hidden + hidden * head_w)
    bytes_accessed = (B_pad * lane(in_dim) * in_sz                       # x
                      + (in_dim * lane(hidden) + hidden * lane(hidden)
                         + hidden * lane(head_w)) * in_sz                # weights
                      + (2 * lane(hidden) + 3 * lane(head_w)) * 4        # bias/bounds
                      + B_pad * lane(head_w) * out_sz)                   # output

    const = lambda i: (0, 0)   # resident weights / biases / clamp bounds
    out = pl.pallas_call(
        kernel,
        out_shape=jax.ShapeDtypeStruct((B_pad, head_w), out_dtype),
        grid_spec=pltpu.PrefetchScalarGridSpec(
            num_scalar_prefetch=0,
            grid=(n_steps,),
            in_specs=[
                pl.BlockSpec((block_b, in_dim), lambda i: (i, 0)),   # x tile
                pl.BlockSpec((in_dim, hidden), const),               # W1
                pl.BlockSpec((1, hidden), const),                    # b1
                pl.BlockSpec((hidden, hidden), const),               # W2
                pl.BlockSpec((1, hidden), const),                    # b2
                pl.BlockSpec((hidden, head_w), const),               # packed heads
                pl.BlockSpec((1, head_w), const),                    # packed bias
                pl.BlockSpec((1, head_w), const),                    # clamp lo
                pl.BlockSpec((1, head_w), const),                    # clamp hi
            ],
            out_specs=pl.BlockSpec((block_b, head_w), lambda i: (i, 0)),
        ),
        compiler_params=pltpu.CompilerParams(
            dimension_semantics=("parallel",)),
        cost_estimate=pl.CostEstimate(
            flops=flops, transcendentals=0, bytes_accessed=bytes_accessed),
    )(x_in, w1, params["b1"], w2, params["b2"], wh, bh, lo, hi)

    mean = out[:B, :out_dim].astype(jnp.float32)
    log_std = out[:B, out_dim:].astype(jnp.float32)
    return mean, log_std


# ----------------------------- init & reference -----------------------------

def orthogonal_weight(key, out_features, in_features, gain):
    """Deterministic orthogonal init (like nn.init.orthogonal_), returned
    transposed to (in_features, out_features) for the x @ W layout."""
    w = jax.nn.initializers.orthogonal(scale=gain)(
        key, (out_features, in_features), jnp.float32)
    return jnp.transpose(w)


def init_params(key, input_dim, output_dim, hidden_dim=64):
    k1, k2, k3, k4 = jax.random.split(key, 4)
    return {
        "w1": orthogonal_weight(k1, hidden_dim, input_dim, 1.414),
        "b1": jnp.zeros((1, hidden_dim), jnp.float32),
        "w2": orthogonal_weight(k2, hidden_dim, hidden_dim, 1.414),
        "b2": jnp.zeros((1, hidden_dim), jnp.float32),
        "wm": orthogonal_weight(k3, output_dim, hidden_dim, 0.01),
        "bm": jnp.zeros((1, output_dim), jnp.float32),
        "ws": orthogonal_weight(k4, output_dim, hidden_dim, 0.01),
        "bs": jnp.full((1, output_dim), 0.5, jnp.float32),
    }


def policy_forward_ref(x, p):
    h1 = jnp.maximum(x @ p["w1"] + p["b1"], 0.0)
    h2 = jnp.maximum(h1 @ p["w2"] + p["b2"], 0.0)
    mean = h2 @ p["wm"] + p["bm"]
    log_std = jnp.clip(h2 @ p["ws"] + p["bs"], -20.0, 2.0)
    return mean, log_std


# TODO(synk): get_action / evaluate (Normal sampling, log_prob, entropy) are
# host-side distribution utilities, not part of the forward pass; they stay in
# plain JAX outside the kernel.

if __name__ == "__main__":
    key = jax.random.PRNGKey(0)
    k_param, k_x1, k_x2 = jax.random.split(key, 3)

    input_dim, output_dim, hidden_dim = 16, 4, 64
    params = init_params(k_param, input_dim, output_dim, hidden_dim)

    # --- small case (B=8, single grid step), exact f32 path ---
    x_small = jax.random.normal(k_x1, (8, input_dim), jnp.float32)
    mean, log_std = policy_forward(x_small, params)
    jax.block_until_ready((mean, log_std))
    mean_r, log_std_r = policy_forward_ref(x_small, params)
    assert mean.shape == (8, output_dim) and log_std.shape == (8, output_dim)
    assert jnp.allclose(mean, mean_r, atol=1e-5, rtol=1e-5)
    assert jnp.allclose(log_std, log_std_r, atol=1e-5, rtol=1e-5)
    assert bool(jnp.all(log_std <= 2.0)) and bool(jnp.all(log_std >= -20.0))

    # --- larger ragged batch, auto tiling (B=1000 -> 2 x 504 rows) ---
    x_big = jax.random.normal(k_x2, (1000, input_dim), jnp.float32)
    mean_b, log_std_b = policy_forward(x_big, params)
    jax.block_until_ready((mean_b, log_std_b))
    mean_br, log_std_br = policy_forward_ref(x_big, params)
    assert mean_b.shape == (1000, output_dim)
    assert jnp.allclose(mean_b, mean_br, atol=1e-4, rtol=1e-4)
    assert jnp.allclose(log_std_b, log_std_br, atol=1e-4, rtol=1e-4)

    # --- explicit tile size (B=1000, TB=256 -> padded to 1024, grid=(4,)) ---
    mean_c, log_std_c = policy_forward(x_big, params, block_b=256)
    jax.block_until_ready((mean_c, log_std_c))
    assert jnp.allclose(mean_c, mean_br, atol=1e-4, rtol=1e-4)
    assert jnp.allclose(log_std_c, log_std_br, atol=1e-4, rtol=1e-4)

    # --- bf16 operands + bf16 output (v6e/v7x-oriented), looser tolerance ---
    mean_h, log_std_h = policy_forward(x_big, params, use_bf16=True,
                                       out_dtype=jnp.bfloat16)
    jax.block_until_ready((mean_h, log_std_h))
    assert jnp.allclose(mean_h, mean_br, atol=5e-2, rtol=5e-2)
    assert jnp.allclose(log_std_h, log_std_br, atol=5e-2, rtol=5e-2)

    print("KERNEL_OK")
</pallas_src>

<mosaic_0001>
module attributes {stable_mosaic.version = 11 : i64} {
  func.func @policy_kernel(%arg0: i32, %arg1: memref<8x16xf32, #tpu.memory_space<vmem>>, %arg2: memref<16x64xf32, #tpu.memory_space<vmem>>, %arg3: memref<1x64xf32, #tpu.memory_space<vmem>>, %arg4: memref<64x64xf32, #tpu.memory_space<vmem>>, %arg5: memref<1x64xf32, #tpu.memory_space<vmem>>, %arg6: memref<64x8xf32, #tpu.memory_space<vmem>>, %arg7: memref<1x8xf32, #tpu.memory_space<vmem>>, %arg8: memref<1x8xf32, #tpu.memory_space<vmem>>, %arg9: memref<1x8xf32, #tpu.memory_space<vmem>>, %arg10: memref<8x8xf32, #tpu.memory_space<vmem>>) attributes {dimension_semantics = [#tpu.dimension_semantics<parallel>], iteration_bounds = array<i64: 1>, scalar_prefetch = 0 : i64, scratch_operands = 0 : i64, tpu.core_type = #tpu.core_type<tc>, window_params = [{transform_indices = @transform_0, window_bounds = array<i64: 8, 16>}, {pipeline_mode = #tpu.pipeline_mode<synchronous>, transform_indices = @transform_1, window_bounds = array<i64: 16, 64>}, {pipeline_mode = #tpu.pipeline_mode<synchronous>, transform_indices = @transform_2, window_bounds = array<i64: 1, 64>}, {pipeline_mode = #tpu.pipeline_mode<synchronous>, transform_indices = @transform_3, window_bounds = array<i64: 64, 64>}, {pipeline_mode = #tpu.pipeline_mode<synchronous>, transform_indices = @transform_4, window_bounds = array<i64: 1, 64>}, {pipeline_mode = #tpu.pipeline_mode<synchronous>, transform_indices = @transform_5, window_bounds = array<i64: 64, 8>}, {pipeline_mode = #tpu.pipeline_mode<synchronous>, transform_indices = @transform_6, window_bounds = array<i64: 1, 8>}, {pipeline_mode = #tpu.pipeline_mode<synchronous>, transform_indices = @transform_7, window_bounds = array<i64: 1, 8>}, {pipeline_mode = #tpu.pipeline_mode<synchronous>, transform_indices = @transform_8, window_bounds = array<i64: 1, 8>}, {transform_indices = @transform_9, window_bounds = array<i64: 8, 8>}]} {
    %c0 = arith.constant 0 : index
    %c0_0 = arith.constant 0 : index
    %0 = vector.load %arg1[%c0, %c0_0] : memref<8x16xf32, #tpu.memory_space<vmem>>, vector<8x16xf32>
    %c0_1 = arith.constant 0 : index
    %c0_2 = arith.constant 0 : index
    %1 = vector.load %arg2[%c0_1, %c0_2] : memref<16x64xf32, #tpu.memory_space<vmem>>, vector<16x64xf32>
    %cst = arith.constant dense<0.000000e+00> : vector<8x64xf32>
    %2 = tpu.matmul %0, %1, %cst {dimension_numbers = #tpu.dot_dimension_numbers<[1], [0], [0], [1], [0, 0, 1, 1], [], []>} : vector<8x16xf32>, vector<16x64xf32>, vector<8x64xf32> -> vector<8x64xf32>
    %c0_3 = arith.constant 0 : index
    %c0_4 = arith.constant 0 : index
    %3 = vector.load %arg3[%c0_3, %c0_4] : memref<1x64xf32, #tpu.memory_space<vmem>>, vector<1x64xf32>
    %4 = vector.broadcast %3 : vector<1x64xf32> to vector<8x64xf32>
    %5 = arith.addf %2, %4 : vector<8x64xf32>
    %cst_5 = arith.constant 0.000000e+00 : f32
    %6 = vector.broadcast %cst_5 : f32 to vector<8x64xf32>
    %7 = arith.maximumf %5, %6 : vector<8x64xf32>
    %c0_6 = arith.constant 0 : index
    %c0_7 = arith.constant 0 : index
    %8 = vector.load %arg4[%c0_6, %c0_7] : memref<64x64xf32, #tpu.memory_space<vmem>>, vector<64x64xf32>
    %cst_8 = arith.constant dense<0.000000e+00> : vector<8x64xf32>
    %9 = tpu.matmul %7, %8, %cst_8 {dimension_numbers = #tpu.dot_dimension_numbers<[1], [0], [0], [1], [0, 0, 1, 1], [], []>} : vector<8x64xf32>, vector<64x64xf32>, vector<8x64xf32> -> vector<8x64xf32>
    %c0_9 = arith.constant 0 : index
    %c0_10 = arith.constant 0 : index
    %10 = vector.load %arg5[%c0_9, %c0_10] : memref<1x64xf32, #tpu.memory_space<vmem>>, vector<1x64xf32>
    %11 = vector.broadcast %10 : vector<1x64xf32> to vector<8x64xf32>
    %12 = arith.addf %9, %11 : vector<8x64xf32>
    %cst_11 = arith.constant 0.000000e+00 : f32
    %13 = vector.broadcast %cst_11 : f32 to vector<8x64xf32>
    %14 = arith.maximumf %12, %13 : vector<8x64xf32>
    %c0_12 = arith.constant 0 : index
    %c0_13 = arith.constant 0 : index
    %15 = vector.load %arg6[%c0_12, %c0_13] : memref<64x8xf32, #tpu.memory_space<vmem>>, vector<64x8xf32>
    %cst_14 = arith.constant dense<0.000000e+00> : vector<8x8xf32>
    %16 = tpu.matmul %14, %15, %cst_14 {dimension_numbers = #tpu.dot_dimension_numbers<[1], [0], [0], [1], [0, 0, 1, 1], [], []>} : vector<8x64xf32>, vector<64x8xf32>, vector<8x8xf32> -> vector<8x8xf32>
    %c0_15 = arith.constant 0 : index
    %c0_16 = arith.constant 0 : index
    %17 = vector.load %arg7[%c0_15, %c0_16] : memref<1x8xf32, #tpu.memory_space<vmem>>, vector<1x8xf32>
    %18 = vector.broadcast %17 : vector<1x8xf32> to vector<8x8xf32>
    %19 = arith.addf %16, %18 : vector<8x8xf32>
    %c0_17 = arith.constant 0 : index
    %c0_18 = arith.constant 0 : index
    %20 = vector.load %arg8[%c0_17, %c0_18] : memref<1x8xf32, #tpu.memory_space<vmem>>, vector<1x8xf32>
    %21 = vector.broadcast %20 : vector<1x8xf32> to vector<8x8xf32>
    %22 = arith.maximumf %19, %21 : vector<8x8xf32>
    %c0_19 = arith.constant 0 : index
    %c0_20 = arith.constant 0 : index
    %23 = vector.load %arg9[%c0_19, %c0_20] : memref<1x8xf32, #tpu.memory_space<vmem>>, vector<1x8xf32>
    %24 = vector.broadcast %23 : vector<1x8xf32> to vector<8x8xf32>
    %25 = arith.minimumf %22, %24 : vector<8x8xf32>
    %c0_21 = arith.constant 0 : index
    %c0_22 = arith.constant 0 : index
    %26 = vector.load %arg10[%c0_21, %c0_22] : memref<8x8xf32, #tpu.memory_space<vmem>>, vector<8x8xf32>
    tpu.vector_store %arg10[%c0_21, %c0_22], %25 {strides = array<i32>} : memref<8x8xf32, #tpu.memory_space<vmem>>, vector<8x8xf32>,
    return
  }
  func.func @transform_0(%arg0: i32) -> (i32, i32) {
    %c0_i32 = arith.constant 0 : i32
    %c0_i32_0 = arith.constant 0 : i32
    return %arg0, %c0_i32 : i32, i32
  }
  func.func @transform_1(%arg0: i32) -> (i32, i32) {
    %c0_i32 = arith.constant 0 : i32
    %c0_i32_0 = arith.constant 0 : i32
    %c0_i32_1 = arith.constant 0 : i32
    return %c0_i32, %c0_i32_0 : i32, i32
  }
  func.func @transform_2(%arg0: i32) -> (i32, i32) {
    %c0_i32 = arith.constant 0 : i32
    %c0_i32_0 = arith.constant 0 : i32
    %c0_i32_1 = arith.constant 0 : i32
    return %c0_i32, %c0_i32_0 : i32, i32
  }
  func.func @transform_3(%arg0: i32) -> (i32, i32) {
    %c0_i32 = arith.constant 0 : i32
    %c0_i32_0 = arith.constant 0 : i32
    %c0_i32_1 = arith.constant 0 : i32
    return %c0_i32, %c0_i32_0 : i32, i32
  }
  func.func @transform_4(%arg0: i32) -> (i32, i32) {
    %c0_i32 = arith.constant 0 : i32
    %c0_i32_0 = arith.constant 0 : i32
    %c0_i32_1 = arith.constant 0 : i32
    return %c0_i32, %c0_i32_0 : i32, i32
  }
  func.func @transform_5(%arg0: i32) -> (i32, i32) {
    %c0_i32 = arith.constant 0 : i32
    %c0_i32_0 = arith.constant 0 : i32
    %c0_i32_1 = arith.constant 0 : i32
    return %c0_i32, %c0_i32_0 : i32, i32
  }
  func.func @transform_6(%arg0: i32) -> (i32, i32) {
    %c0_i32 = arith.constant 0 : i32
    %c0_i32_0 = arith.constant 0 : i32
    %c0_i32_1 = arith.constant 0 : i32
    return %c0_i32, %c0_i32_0 : i32, i32
  }
  func.func @transform_7(%arg0: i32) -> (i32, i32) {
    %c0_i32 = arith.constant 0 : i32
    %c0_i32_0 = arith.constant 0 : i32
    %c0_i32_1 = arith.constant 0 : i32
    return %c0_i32, %c0_i32_0 : i32, i32
  }
  func.func @transform_8(%arg0: i32) -> (i32, i32) {
    %c0_i32 = arith.constant 0 : i32
    %c0_i32_0 = arith.constant 0 : i32
    %c0_i32_1 = arith.constant 0 : i32
    return %c0_i32, %c0_i32_0 : i32, i32
  }
  func.func @transform_9(%arg0: i32) -> (i32, i32) {
    %c0_i32 = arith.constant 0 : i32
    %c0_i32_0 = arith.constant 0 : i32
    return %arg0, %c0_i32 : i32, i32
  }
}

</mosaic_0001>

<llo_original>
// kernel: tpu_custom_call.1
$region0: #{tpu_custom_call.1}
  #allocation0 [shape = 'u32[]', space=smem, size = 0x4, offset = 0x4, fixed_abs, tag = 'smem constant byte address 0x4 - core index']
  #allocation1 [shape = 'u32[144,128]{1,0:T(1,128)}', space=vmem, size = 0x12000, scoped, tag = 'internal scratch']
  %s0 = inlined_call_operand.hbm [shape: f32[8,16], index: 0, kind: input, shape index: {}]
  %s1 = inlined_call_operand.vmem [shape: f32[16,64], index: 1, kind: input, shape index: {}]
  %s2 = inlined_call_operand.vmem [shape: f32[1,64], index: 2, kind: input, shape index: {}]
  %s3 = inlined_call_operand.vmem [shape: f32[64,64], index: 3, kind: input, shape index: {}]
  %s4 = inlined_call_operand.vmem [shape: f32[1,64], index: 4, kind: input, shape index: {}]
  %s5 = inlined_call_operand.vmem [shape: f32[64,8], index: 5, kind: input, shape index: {}]
  %s6 = inlined_call_operand.vmem [shape: f32[1,8], index: 6, kind: input, shape index: {}]
  %s7 = inlined_call_operand.vmem [shape: f32[1,8], index: 7, kind: input, shape index: {}]
  %s8 = inlined_call_operand.vmem [shape: f32[1,8], index: 8, kind: input, shape index: {}]
  %s9 = inlined_call_operand.hbm [shape: f32[8,8], index: 9, kind: output, shape index: {}]
  %s10 = sld [smem:[#allocation0]]
  $region50: #{tpu_custom_call.1} parent=0
    _
  %s12 = ssub.s32 1, %s10
  %s13 = scalar_select 0, %s12, %s10
  $region1: #{tpu_custom_call.1} parent=0
    #allocation2 [shape = 'u8[4096]{0}', space=vmem, size = 0x1000, scoped, tag = 'input window, operand 0, single buffered']
    #allocation3 [shape = 's32[1]{0}', space=sflag, size = 0x4, scoped, tag = 'scoped memory for tpu_custom_call.1']
    #allocation4 [shape = 's32[1]{0}', space=sflag, size = 0x4, scoped, tag = 'scoped memory for tpu_custom_call.1']
    #allocation5 [shape = 'u8[4096]{0}', space=vmem, size = 0x1000, scoped, tag = 'output window, operand 0, single buffered']
    %14 = vsyncpa [#allocation3], 0
    %15 = vsyncpa [#allocation4], 0
    // Predicated region
    $region2: #{tpu_custom_call.1} parent=1 // pred_check
      _
    $region3: #{tpu_custom_call.1} parent=1 // pred_check_branch
      %17 = sbr.rel (0) target = $region5
    $region4: #{tpu_custom_call.1} parent=1 // pred_region
      %s19 = ssub.s32 128, 128
      %20 = vsyncadd [#allocation3], %s19
      %s22 = sshll.u32 [#allocation2], 4
      %s23 = int_to_ptr.vmem [resolvable:$true] %s22
      %25 = dma.hbm_to_vmem [thread:$0]  %s0, 128, %s23, [#allocation3]
    $region5: #{tpu_custom_call.1} parent=1 // pred_fallthru
      _
    // Predicated region
    $region6: #{tpu_custom_call.1} parent=1 // pred_check
      _
    $region7: #{tpu_custom_call.1} parent=1 // pred_check_branch
      %27 = sbr.rel (0) target = $region9
    $region8: #{tpu_custom_call.1} parent=1 // pred_region
      _
    $region9: #{tpu_custom_call.1} parent=1 // pred_fallthru
      _
    // Predicated region
    $region10: #{tpu_custom_call.1} parent=1 // pred_check
      _
    $region11: #{tpu_custom_call.1} parent=1 // pred_check_branch
      %29 = sbr.rel (0) target = $region13
    $region12: #{tpu_custom_call.1} parent=1 // pred_region
      _
    $region13: #{tpu_custom_call.1} parent=1 // pred_fallthru
      _
    // Predicated region
    $region14: #{tpu_custom_call.1} parent=1 // pred_check
      _
    $region15: #{tpu_custom_call.1} parent=1 // pred_check_branch
      %31 = sbr.rel (0) target = $region17
    $region16: #{tpu_custom_call.1} parent=1 // pred_region
      _
    $region17: #{tpu_custom_call.1} parent=1 // pred_fallthru
      _
    // Predicated region
    $region18: #{tpu_custom_call.1} parent=1 // pred_check
      _
    $region19: #{tpu_custom_call.1} parent=1 // pred_check_branch
      %33 = sbr.rel (0) target = $region21
    $region20: #{tpu_custom_call.1} parent=1 // pred_region
      _
    $region21: #{tpu_custom_call.1} parent=1 // pred_fallthru
      _
    // Predicated region
    $region22: #{tpu_custom_call.1} parent=1 // pred_check
      _
    $region23: #{tpu_custom_call.1} parent=1 // pred_check_branch
      %35 = sbr.rel (0) target = $region25
    $region24: #{tpu_custom_call.1} parent=1 // pred_region
      _
    $region25: #{tpu_custom_call.1} parent=1 // pred_fallthru
      _
    // Predicated region
    $region26: #{tpu_custom_call.1} parent=1 // pred_check
      _
    $region27: #{tpu_custom_call.1} parent=1 // pred_check_branch
      %37 = sbr.rel (0) target = $region29
    $region28: #{tpu_custom_call.1} parent=1 // pred_region
      _
    $region29: #{tpu_custom_call.1} parent=1 // pred_fallthru
      _
    // Predicated region
    $region30: #{tpu_custom_call.1} parent=1 // pred_check
      _
    $region31: #{tpu_custom_call.1} parent=1 // pred_check_branch
      %39 = sbr.rel (0) target = $region33
    $region32: #{tpu_custom_call.1} parent=1 // pred_region
      _
    $region33: #{tpu_custom_call.1} parent=1 // pred_fallthru
      _
    // Predicated region
    $region34: #{tpu_custom_call.1} parent=1 // pred_check
      _
    $region35: #{tpu_custom_call.1} parent=1 // pred_check_branch
      %41 = sbr.rel (0) target = $region37
    $region36: #{tpu_custom_call.1} parent=1 // pred_region
      _
    $region37: #{tpu_custom_call.1} parent=1 // pred_fallthru
      _
    // Predicated region
    $region38: #{tpu_custom_call.1} parent=1 // pred_check
      _
    $region39: #{tpu_custom_call.1} parent=1 // pred_check_branch
      %43 = sbr.rel (0) target = $region41
    $region40: #{tpu_custom_call.1} parent=1 // pred_region
      %44 = dma.done [#allocation3], 128
    $region41: #{tpu_custom_call.1} parent=1 // pred_fallthru
      _
    %v45 = vld [vmem:[#allocation2] sm:$0xff]
    %v46 = vld [vmem:[%s1] sm:$0xff]
    %v47 = vld [vmem:[%s1 + $0x8] sm:$0xff]
    %v48 = vld [vmem:[%s2] sm:$0x1]
    %v50 = vlaneseq
    %v51 = vshrl.u32 %v50, 7
    %v52 = vsub.s32 0, %v51
    %v53 = vrot.slane %v48, %v52
    %vm55 = vcmask 130048
    %v57 = vsel %vm55, %v45, 0
    %59 = vmatprep.subr.mxu0 0.0
    %60 = vmatpush1.msra.mxu0 %v46
    %61 = vmatprep.subr.mxu0 0.0
    %62 = vmatpush1.msra.mxu0 %v47
    %63 = vmatprep.subr.mxu0 0.0
    %64 = vmatpush1.msra.mxu0 0.0
    %65 = vmatprep.subr.mxu0 0.0
    %66 = vmatpush1.msra.mxu0 0.0
    %67 = vmatprep.subr.mxu0 0.0
    %68 = vmatpush1.msra.mxu0 0.0
    %69 = vmatprep.subr.mxu0 0.0
    %70 = vmatpush1.msra.mxu0 0.0
    %71 = vmatprep.subr.mxu0 0.0
    %72 = vmatpush1.msra.mxu0 0.0
    %73 = vmatprep.subr.mxu0 0.0
    %74 = vmatpush1.msra.mxu0 0.0
    %75 = vmatprep.subr.mxu0 0.0
    %76 = vmatpush1.msra.mxu0 0.0
    %77 = vmatprep.subr.mxu0 0.0
    %78 = vmatpush1.msra.mxu0 0.0
    %79 = vmatprep.subr.mxu0 0.0
    %80 = vmatpush1.msra.mxu0 0.0
    %81 = vmatprep.subr.mxu0 0.0
    %82 = vmatpush1.msra.mxu0 0.0
    %83 = vmatprep.subr.mxu0 0.0
    %84 = vmatpush1.msra.mxu0 0.0
    %85 = vmatprep.subr.mxu0 0.0
    %86 = vmatpush1.msra.mxu0 0.0
    %87 = vmatprep.subr.mxu0 0.0
    %88 = vmatpush1.msra.mxu0 0.0
    %89 = vmatprep.subr.mxu0 0.0
    %90 = vmatpush1.msra.mxu0 0.0
    %91 = vmatprep.subr.mxu0 0.0
    %92 = vmatpush1.msra.mxu0 0.0
    %93 = vmatprep.subr.mxu0 0.0
    %94 = vmatpush1.msra.mxu0 0.0
    %95 = vmatprep.subr.mxu0 0.0
    %96 = vmatpush1.msra.mxu0 0.0
    %97 = vmatprep.subr.mxu0 0.0
    %98 = vmatpush1.msra.mxu0 0.0
    %99 = vmatprep.subr.mxu0 0.0
    %100 = vmatpush1.msra.mxu0 0.0
    %101 = vmatprep.subr.mxu0 0.0
    %102 = vmatpush1.msra.mxu0 0.0
    %103 = vmatprep.subr.mxu0 0.0
    %104 = vmatpush1.msra.mxu0 0.0
    %105 = vmatprep.subr.mxu0 0.0
    %106 = vmatpush1.msra.mxu0 0.0
    %107 = vmatprep.subr.mxu0 0.0
    %108 = vmatpush1.msra.mxu0 0.0
    %109 = vmatprep.subr.mxu0 0.0
    %110 = vmatpush1.msra.mxu0 0.0
    %111 = vmatprep.subr.mxu0 0.0
    %112 = vmatpush1.msra.mxu0 0.0
    %113 = vmatprep.subr.mxu0 0.0
    %114 = vmatpush1.msra.mxu0 0.0
    %115 = vmatprep.subr.mxu0 0.0
    %116 = vmatpush1.msra.mxu0 0.0
    %117 = vmatprep.subr.mxu0 0.0
    %118 = vmatpush1.msra.mxu0 0.0
    %119 = vmatprep.subr.mxu0 0.0
    %120 = vmatpush1.msra.mxu0 0.0
    %121 = vmatprep.subr.mxu0 0.0
    %122 = vmatpush1.msra.mxu0 0.0
    %123 = vmatprep.mubr.f32.mxu0 0.0
    %124 = vmatmul.mubr.f32.gmra.mrb[0].mxu0 %v57
    %v125 = vpop.f32.mrb[0].mxu0
    %v126 = vadd.f32 %v53, %v125
    %v127 = vpop.f32.mrb[0].mxu0
    %128 = vdwg.mxu0
    %v129 = vmax.f32 %v126, 0.0
    %v130 = vld [vmem:[%s3] sm:$0xff]
    %v131 = vld [vmem:[%s3 + $0x8] sm:$0xff]
    %v132 = vld [vmem:[%s3 + $0x10] sm:$0xff]
    %v133 = vld [vmem:[%s3 + $0x18] sm:$0xff]
    %v134 = vld [vmem:[%s3 + $0x20] sm:$0xff]
    %v135 = vld [vmem:[%s3 + $0x28] sm:$0xff]
    %v136 = vld [vmem:[%s3 + $0x30] sm:$0xff]
    %v137 = vld [vmem:[%s3 + $0x38] sm:$0xff]
    %v138 = vld [vmem:[%s4] sm:$0x1]
    %v140 = vlaneseq
    %v141 = vshrl.u32 %v140, 7
    %v142 = vsub.s32 0, %v141
    %v143 = vrot.slane %v138, %v142
    %vm145 = vcmask 523264
    %v147 = vsel %vm145, %v129, 0
    %149 = vmatprep.subr.mxu0 0.0
    %150 = vmatpush1.msra.mxu0 %v130
    %151 = vmatprep.subr.mxu0 0.0
    %152 = vmatpush1.msra.mxu0 %v131
    %153 = vmatprep.subr.mxu0 0.0
    %154 = vmatpush1.msra.mxu0 %v132
    %155 = vmatprep.subr.mxu0 0.0
    %156 = vmatpush1.msra.mxu0 %v133
    %157 = vmatprep.subr.mxu0 0.0
    %158 = vmatpush1.msra.mxu0 %v134
    %159 = vmatprep.subr.mxu0 0.0
    %160 = vmatpush1.msra.mxu0 %v135
    %161 = vmatprep.subr.mxu0 0.0
    %162 = vmatpush1.msra.mxu0 %v136
    %163 = vmatprep.subr.mxu0 0.0
    %164 = vmatpush1.msra.mxu0 %v137
    %165 = vmatprep.subr.mxu0 0.0
    %166 = vmatpush1.msra.mxu0 0.0
    %167 = vmatprep.subr.mxu0 0.0
    %168 = vmatpush1.msra.mxu0 0.0
    %169 = vmatprep.subr.mxu0 0.0
    %170 = vmatpush1.msra.mxu0 0.0
    %171 = vmatprep.subr.mxu0 0.0
    %172 = vmatpush1.msra.mxu0 0.0
    %173 = vmatprep.subr.mxu0 0.0
    %174 = vmatpush1.msra.mxu0 0.0
    %175 = vmatprep.subr.mxu0 0.0
    %176 = vmatpush1.msra.mxu0 0.0
    %177 = vmatprep.subr.mxu0 0.0
    %178 = vmatpush1.msra.mxu0 0.0
    %179 = vmatprep.subr.mxu0 0.0
    %180 = vmatpush1.msra.mxu0 0.0
    %181 = vmatprep.subr.mxu0 0.0
    %182 = vmatpush1.msra.mxu0 0.0
    %183 = vmatprep.subr.mxu0 0.0
    %184 = vmatpush1.msra.mxu0 0.0
    %185 = vmatprep.subr.mxu0 0.0
    %186 = vmatpush1.msra.mxu0 0.0
    %187 = vmatprep.subr.mxu0 0.0
    %188 = vmatpush1.msra.mxu0 0.0
    %189 = vmatprep.subr.mxu0 0.0
    %190 = vmatpush1.msra.mxu0 0.0
    %191 = vmatprep.subr.mxu0 0.0
    %192 = vmatpush1.msra.mxu0 0.0
    %193 = vmatprep.subr.mxu0 0.0
    %194 = vmatpush1.msra.mxu0 0.0
    %195 = vmatprep.subr.mxu0 0.0
    %196 = vmatpush1.msra.mxu0 0.0
    %197 = vmatprep.subr.mxu0 0.0
    %198 = vmatpush1.msra.mxu0 0.0
    %199 = vmatprep.subr.mxu0 0.0
    %200 = vmatpush1.msra.mxu0 0.0
    %201 = vmatprep.subr.mxu0 0.0
    %202 = vmatpush1.msra.mxu0 0.0
    %203 = vmatprep.subr.mxu0 0.0
    %204 = vmatpush1.msra.mxu0 0.0
    %205 = vmatprep.subr.mxu0 0.0
    %206 = vmatpush1.msra.mxu0 0.0
    %207 = vmatprep.subr.mxu0 0.0
    %208 = vmatpush1.msra.mxu0 0.0
    %209 = vmatprep.subr.mxu0 0.0
    %210 = vmatpush1.msra.mxu0 0.0
    %211 = vmatprep.subr.mxu0 0.0
    %212 = vmatpush1.msra.mxu0 0.0
    %213 = vmatprep.mubr.f32.mxu0 0.0
    %214 = vmatmul.mubr.f32.gmra.mrb[0].mxu0 %v147
    %v215 = vpop.f32.mrb[0].mxu0
    %v216 = vadd.f32 %v143, %v215
    %v217 = vpop.f32.mrb[0].mxu0
    %218 = vdwg.mxu0
    %v219 = vmax.f32 %v216, 0.0
    %v220 = vld [vmem:[%s5] sm:$0xff]
    %v221 = vld [vmem:[%s5 + $0x8] sm:$0xff]
    %v222 = vld [vmem:[%s5 + $0x10] sm:$0xff]
    %v223 = vld [vmem:[%s5 + $0x18] sm:$0xff]
    %v224 = vld [vmem:[%s5 + $0x20] sm:$0xff]
    %v225 = vld [vmem:[%s5 + $0x28] sm:$0xff]
    %v226 = vld [vmem:[%s5 + $0x30] sm:$0xff]
    %v227 = vld [vmem:[%s5 + $0x38] sm:$0xff]
    %v228 = vld [vmem:[%s6] sm:$0x1]
    %v230 = vlaneseq
    %v231 = vshrl.u32 %v230, 7
    %v232 = vsub.s32 0, %v231
    %v233 = vrot.slane %v228, %v232
    %v236 = vsel %vm145, %v219, 0
    %238 = vmatprep.subr.mxu0 0.0
    %239 = vmatpush1.msra.mxu0 %v220
    %240 = vmatprep.subr.mxu0 0.0
    %241 = vmatpush1.msra.mxu0 %v221
    %242 = vmatprep.subr.mxu0 0.0
    %243 = vmatpush1.msra.mxu0 %v222
    %244 = vmatprep.subr.mxu0 0.0
    %245 = vmatpush1.msra.mxu0 %v223
    %246 = vmatprep.subr.mxu0 0.0
    %247 = vmatpush1.msra.mxu0 %v224
    %248 = vmatprep.subr.mxu0 0.0
    %249 = vmatpush1.msra.mxu0 %v225
    %250 = vmatprep.subr.mxu0 0.0
    %251 = vmatpush1.msra.mxu0 %v226
    %252 = vmatprep.subr.mxu0 0.0
    %253 = vmatpush1.msra.mxu0 %v227
    %254 = vmatprep.subr.mxu0 0.0
    %255 = vmatpush1.msra.mxu0 0.0
    %256 = vmatprep.subr.mxu0 0.0
    %257 = vmatpush1.msra.mxu0 0.0
    %258 = vmatprep.subr.mxu0 0.0
    %259 = vmatpush1.msra.mxu0 0.0
    %260 = vmatprep.subr.mxu0 0.0
    %261 = vmatpush1.msra.mxu0 0.0
    %262 = vmatprep.subr.mxu0 0.0
    %263 = vmatpush1.msra.mxu0 0.0
    %264 = vmatprep.subr.mxu0 0.0
    %265 = vmatpush1.msra.mxu0 0.0
    %266 = vmatprep.subr.mxu0 0.0
    %267 = vmatpush1.msra.mxu0 0.0
    %268 = vmatprep.subr.mxu0 0.0
    %269 = vmatpush1.msra.mxu0 0.0
    %270 = vmatprep.subr.mxu0 0.0
    %271 = vmatpush1.msra.mxu0 0.0
    %272 = vmatprep.subr.mxu0 0.0
    %273 = vmatpush1.msra.mxu0 0.0
    %274 = vmatprep.subr.mxu0 0.0
    %275 = vmatpush1.msra.mxu0 0.0
    %276 = vmatprep.subr.mxu0 0.0
    %277 = vmatpush1.msra.mxu0 0.0
    %278 = vmatprep.subr.mxu0 0.0
    %279 = vmatpush1.msra.mxu0 0.0
    %280 = vmatprep.subr.mxu0 0.0
    %281 = vmatpush1.msra.mxu0 0.0
    %282 = vmatprep.subr.mxu0 0.0
    %283 = vmatpush1.msra.mxu0 0.0
    %284 = vmatprep.subr.mxu0 0.0
    %285 = vmatpush1.msra.mxu0 0.0
    %286 = vmatprep.subr.mxu0 0.0
    %287 = vmatpush1.msra.mxu0 0.0
    %288 = vmatprep.subr.mxu0 0.0
    %289 = vmatpush1.msra.mxu0 0.0
    %290 = vmatprep.subr.mxu0 0.0
    %291 = vmatpush1.msra.mxu0 0.0
    %292 = vmatprep.subr.mxu0 0.0
    %293 = vmatpush1.msra.mxu0 0.0
    %294 = vmatprep.subr.mxu0 0.0
    %295 = vmatpush1.msra.mxu0 0.0
    %296 = vmatprep.subr.mxu0 0.0
    %297 = vmatpush1.msra.mxu0 0.0
    %298 = vmatprep.subr.mxu0 0.0
    %299 = vmatpush1.msra.mxu0 0.0
    %300 = vmatprep.subr.mxu0 0.0
    %301 = vmatpush1.msra.mxu0 0.0
    %302 = vmatprep.mubr.f32.mxu0 0.0
    %303 = vmatmul.mubr.f32.gmra.mrb[0].mxu0 %v236
    %v304 = vpop.f32.mrb[0].mxu0
    %v305 = vadd.f32 %v233, %v304
    %v306 = vpop.f32.mrb[0].mxu0
    %307 = vdwg.mxu0
    %v308 = vld [vmem:[%s7] sm:$0x1]
    %v310 = vlaneseq
    %v311 = vshrl.u32 %v310, 7
    %v312 = vsub.s32 0, %v311
    %v313 = vrot.slane %v308, %v312
    %v315 = vmax.f32 %v305, %v313
    %v316 = vld [vmem:[%s8] sm:$0x1]
    %v318 = vlaneseq
    %v319 = vshrl.u32 %v318, 7
    %v320 = vsub.s32 0, %v319
    %v321 = vrot.slane %v316, %v320
    %v323 = vmin.f32 %v315, %v321
    %vm324 = vcmask 64512
    %325 = vst.msk [vmem:[#allocation5] sm:$0xff] %vm324, %v323
    // Predicated region
    $region42: #{tpu_custom_call.1} parent=1 // pred_check
      _
    $region43: #{tpu_custom_call.1} parent=1 // pred_check_branch
      %327 = sbr.rel (0) target = $region45
    $region44: #{tpu_custom_call.1} parent=1 // pred_region
      %s329 = ssub.s32 128, 128
      %330 = vsyncadd [#allocation4], %s329
      %s332 = sshll.u32 [#allocation5], 4
      %s333 = int_to_ptr.vmem [resolvable:$true] %s332
      %335 = dma.vmem_to_hbm [thread:$0]  %s333, 128, %s9, [#allocation4]
    $region45: #{tpu_custom_call.1} parent=1 // pred_fallthru
      _
    // Predicated region
    $region46: #{tpu_custom_call.1} parent=1 // pred_check
      _
    $region47: #{tpu_custom_call.1} parent=1 // pred_check_branch
      %337 = sbr.rel (0) target = $region49
    $region48: #{tpu_custom_call.1} parent=1 // pred_region
      %338 = dma.done [#allocation4], 128
    $region49: #{tpu_custom_call.1} parent=1 // pred_fallthru
      _
    %339 = vsyncpa [#allocation3], 1
    %340 = vsyncpa [#allocation4], 1

</llo_original>
